<compile_context>
chip_gen: v7x
topology: tpu7x:2x2x1
jax: 0.10.0
libtpu: 0.0.40
codegen_flags: <defaults>
</compile_context>

<pallas_src>
import functools

import jax
import jax.numpy as jnp
from jax import lax
from jax.experimental import pallas as pl
from jax.experimental.pallas import tpu as pltpu

EPS = 1e-6


def _normalize_rows(x, out_dtype):
    """Row-wise L2 normalization in f32, cast to the kernel's matmul dtype."""
    xf = x.astype(jnp.float32)
    sq = jnp.sum(xf * xf, axis=-1, keepdims=True)
    return (xf * lax.rsqrt(jnp.maximum(sq, EPS * EPS))).astype(out_dtype)


def _pick_tile(n, target, prefer_even_count=False):
    """Largest multiple-of-8 divisor of n that is <= target (fallback: n)."""
    cands = [d for d in range(8, min(n, target) + 1, 8) if n % d == 0]
    if not cands:
        return n
    if prefer_even_count:
        even = [d for d in cands if (n // d) % 2 == 0]
        if even:
            return max(even)
    return max(cands)


def _ref_infonce_kernel(fq_ref, rq_ref, fc_ref, nc_ref, rc_ref,
                        out_ref, neg_acc, pos_acc, *, ew_dtype):
    i = pl.program_id(0)          # row tile
    j = pl.program_id(1)          # column tile (reduction axis, innermost)
    tm = fq_ref.shape[0]
    tc = fc_ref.shape[0]

    @pl.when(j == 0)
    def _init():
        neg_acc[...] = jnp.zeros_like(neg_acc)
        pos_acc[...] = jnp.zeros_like(pos_acc)

    # Rows are already unit-norm, so the dots emit cosines directly.  Contract
    # the last (lane) axis of both operands -> no transposes feeding the MXU.
    dims = (((1,), (1,)), ((), ()))
    cos_noise = lax.dot_general(fq_ref[...], nc_ref[...], dims,
                                preferred_element_type=jnp.float32)  # (tm, tc)
    cos_f = lax.dot_general(fq_ref[...], fc_ref[...], dims,
                            preferred_element_type=jnp.float32)      # (tm, tc)
    cos_ref = lax.dot_general(rq_ref[...], rc_ref[...], dims,
                              preferred_element_type=jnp.float32)    # (tm, tc)

    # Global row/column indices of this (tm, tc) block.  Excluded negatives
    # (j == i and j == i + B in the concatenated matrix) both land at
    # global_col == global_row in this decomposition.
    row = lax.broadcasted_iota(jnp.int32, (tm, tc), 0) + i * tm
    col = lax.broadcasted_iota(jnp.int32, (tm, tc), 1) + j * tc
    on_diag = col == row

    # Negative-pair weights and exp terms.  Elementwise math in ew_dtype (bf16
    # on v6e/v7x), reduced in f32.
    w = ((1.0 - cos_ref) * 0.5).astype(ew_dtype)
    m_sum = jnp.exp(cos_noise.astype(ew_dtype)) + jnp.exp(cos_f.astype(ew_dtype))
    contrib = jnp.where(on_diag, 0.0, w * m_sum)
    neg_acc[...] += jnp.sum(contrib.astype(jnp.float32),
                            axis=-1, keepdims=True)

    # Positive term: diagonal of cos(f_i, noise_j) (exp cancels with the log).
    # Same MXU/accumulation path as the negatives.
    pos_acc[...] += jnp.sum(jnp.where(on_diag, cos_noise, 0.0),
                            axis=-1, keepdims=True)

    @pl.when(j == pl.num_programs(1) - 1)
    def _finalize():
        # loss_i = -log(exp(cos_pos_i) / (neg_i + eps)) = log(neg_i+eps) - cos_pos_i
        out_ref[...] = jnp.log(neg_acc[...] + EPS) - pos_acc[...]


@functools.partial(jax.jit,
                   static_argnames=("block_rows", "block_cols", "compute_in_bf16"))
def ref_infonce_loss(f, noise, ref, block_rows=None, block_cols=None,
                     compute_in_bf16=True):
    B, L = f.shape
    assert noise.shape == (B, L), "f and noise must share the feature dim"
    # TODO(synk): ref with rank > 2 (per-channel cosine broadcasting in the
    # original module) is not supported; only (B, R) reference vectors are.
    assert ref.ndim == 2 and ref.shape[0] == B
    R = ref.shape[1]

    if block_rows is None:
        block_rows = _pick_tile(B, 256, prefer_even_count=True)
    if block_cols is None:
        block_cols = _pick_tile(B, 512)
    # Tiles must divide B and be sublane-aligned (or cover all of B).
    if B % block_rows or (block_rows % 8 and block_rows != B):
        block_rows = _pick_tile(B, 256, prefer_even_count=True)
    if B % block_cols or (block_cols % 8 and block_cols != B):
        block_cols = _pick_tile(B, 512)

    num_row_tiles = B // block_rows
    num_col_tiles = B // block_cols

    mat_dtype = jnp.bfloat16 if compute_in_bf16 else jnp.float32
    ew_dtype = jnp.bfloat16 if compute_in_bf16 else jnp.float32

    # Normalize once, outside the grid loop (tiny O(B*(L+R)) vs O(B^2*L) dots).
    f_n = _normalize_rows(f, mat_dtype)
    noise_n = _normalize_rows(noise, mat_dtype)
    ref_n = _normalize_rows(ref, mat_dtype)

    # Explicit scoped-VMEM budget: double-buffered input blocks + ~8 (tm, tc)
    # f32 temps + scratch/output, with 2x headroom, clamped to [32, 64] MiB.
    itemsize = jnp.dtype(mat_dtype).itemsize
    est = (2 * ((block_rows + 2 * block_cols) * L
                + (block_rows + block_cols) * R) * itemsize
           + 8 * block_rows * block_cols * 4
           + 4 * block_rows * 4)
    vmem_limit_bytes = int(min(64 * 1024 * 1024,
                               max(32 * 1024 * 1024, 2 * est)))

    per_row_loss = pl.pallas_call(
        functools.partial(_ref_infonce_kernel, ew_dtype=ew_dtype),
        out_shape=jax.ShapeDtypeStruct((B, 1), jnp.float32),
        grid=(num_row_tiles, num_col_tiles),
        in_specs=[
            pl.BlockSpec((block_rows, L), lambda i, j: (i, 0)),  # f   row tile
            pl.BlockSpec((block_rows, R), lambda i, j: (i, 0)),  # ref row tile
            pl.BlockSpec((block_cols, L), lambda i, j: (j, 0)),  # f     cols
            pl.BlockSpec((block_cols, L), lambda i, j: (j, 0)),  # noise cols
            pl.BlockSpec((block_cols, R), lambda i, j: (j, 0)),  # ref   cols
        ],
        # Output block resident across the column (reduction) axis; written
        # only on the last column step.  (Lane-dense output layout skipped per
        # review priority — the store is one tiny write per row tile.)
        out_specs=pl.BlockSpec((block_rows, 1), lambda i, j: (i, 0)),
        scratch_shapes=[pltpu.VMEM((block_rows, 1), jnp.float32),   # neg
                        pltpu.VMEM((block_rows, 1), jnp.float32)],  # pos cos
        compiler_params=pltpu.CompilerParams(
            dimension_semantics=("parallel", "arbitrary"),
            vmem_limit_bytes=vmem_limit_bytes),
    )(f_n, ref_n, f_n, noise_n, ref_n)

    # Final mean over B rows: one tiny XLA reduction, keeps the row axis
    # "parallel" for the v7x megacore split.
    return jnp.mean(per_row_loss)


def _reference_jax(f, noise, ref):
    """Vectorized pure-JAX mirror of the PyTorch forward, for validation."""
    B = f.shape[0]
    cat = jnp.concatenate([noise, f], axis=0)                       # (2B, L)
    f_n = jnp.linalg.norm(f, axis=-1)
    c_n = jnp.linalg.norm(cat, axis=-1)
    M = jnp.exp((f @ cat.T) / jnp.maximum(f_n[:, None] * c_n[None, :], EPS))
    r_n = jnp.linalg.norm(ref, axis=-1)
    rcos = (ref @ ref.T) / jnp.maximum(r_n[:, None] * r_n[None, :], EPS)
    w2 = jnp.concatenate([(1.0 - rcos) / 2.0] * 2, axis=1)          # (B, 2B)
    col = jnp.arange(2 * B)[None, :]
    row = jnp.arange(B)[:, None]
    neg_mask = (col != row) & (col != row + B)
    neg = jnp.sum(jnp.where(neg_mask, M * w2, 0.0), axis=-1)
    pos = jnp.diagonal(M[:, :B])
    return jnp.mean(-jnp.log(pos / (neg + EPS)))


if __name__ == "__main__":
    key = jax.random.PRNGKey(0)
    k1, k2, k3 = jax.random.split(key, 3)

    B, L, R = 16, 32, 16
    f = jax.random.normal(k1, (B, L), dtype=jnp.float32)
    noise = jax.random.normal(k2, (B, L), dtype=jnp.float32)
    ref = jax.random.normal(k3, (B, R), dtype=jnp.float32)

    expected = jax.block_until_ready(_reference_jax(f, noise, ref))

    # 1) Full-f32 path on a forced 2x2 grid: exercises the column-block
    #    accumulation (pl.when init / finalize) and validates tightly.
    loss_f32 = jax.block_until_ready(
        ref_infonce_loss(f, noise, ref, block_rows=8, block_cols=8,
                         compute_in_bf16=False))
    assert jnp.allclose(loss_f32, expected, rtol=1e-3, atol=1e-5), (loss_f32, expected)

    # 2) Default fast path: bf16 MXU operands + bf16 elementwise exp/weights.
    loss_bf16 = jax.block_until_ready(ref_infonce_loss(f, noise, ref))
    assert jnp.allclose(loss_bf16, expected, rtol=3e-2, atol=3e-2), (loss_bf16, expected)

    print("KERNEL_OK")
</pallas_src>

<mosaic_0001>
module attributes {stable_mosaic.version = 11 : i64} {
  func.func @_ref_infonce_kernel(%arg0: i32, %arg1: i32, %arg2: memref<8x32xf32, #tpu.memory_space<vmem>>, %arg3: memref<8x16xf32, #tpu.memory_space<vmem>>, %arg4: memref<8x32xf32, #tpu.memory_space<vmem>>, %arg5: memref<8x32xf32, #tpu.memory_space<vmem>>, %arg6: memref<8x16xf32, #tpu.memory_space<vmem>>, %arg7: memref<8x1xf32, #tpu.memory_space<vmem>>, %arg8: memref<8x1xf32, #tpu.memory_space<vmem>>, %arg9: memref<8x1xf32, #tpu.memory_space<vmem>>) attributes {dimension_semantics = [#tpu.dimension_semantics<parallel>, #tpu.dimension_semantics<arbitrary>], iteration_bounds = array<i64: 2, 2>, scalar_prefetch = 0 : i64, scratch_operands = 2 : i64, tpu.core_type = #tpu.core_type<tc>, window_params = [{transform_indices = @transform_0, window_bounds = array<i64: 8, 32>}, {transform_indices = @transform_1, window_bounds = array<i64: 8, 16>}, {transform_indices = @transform_2, window_bounds = array<i64: 8, 32>}, {transform_indices = @transform_3, window_bounds = array<i64: 8, 32>}, {transform_indices = @transform_4, window_bounds = array<i64: 8, 16>}, {transform_indices = @transform_5, window_bounds = array<i64: 8, 1>}]} {
    %c0_i32 = arith.constant 0 : i32
    %0 = arith.cmpi eq, %arg1, %c0_i32 : i32
    %1 = arith.extui %0 : i1 to i32
    %c0_i32_0 = arith.constant 0 : i32
    %2 = arith.cmpi ne, %1, %c0_i32_0 : i32
    scf.if %2 {
      %cst_30 = arith.constant 0.000000e+00 : f32
      %46 = vector.broadcast %cst_30 : f32 to vector<8x1xf32>
      %c0_31 = arith.constant 0 : index
      %c0_32 = arith.constant 0 : index
      %47 = vector.load %arg8[%c0_31, %c0_32] : memref<8x1xf32, #tpu.memory_space<vmem>>, vector<8x1xf32>
      tpu.vector_store %arg8[%c0_31, %c0_32], %46 {strides = array<i32>} : memref<8x1xf32, #tpu.memory_space<vmem>>, vector<8x1xf32>,
      %cst_33 = arith.constant 0.000000e+00 : f32
      %48 = vector.broadcast %cst_33 : f32 to vector<8x1xf32>
      %c0_34 = arith.constant 0 : index
      %c0_35 = arith.constant 0 : index
      %49 = vector.load %arg9[%c0_34, %c0_35] : memref<8x1xf32, #tpu.memory_space<vmem>>, vector<8x1xf32>
      tpu.vector_store %arg9[%c0_34, %c0_35], %48 {strides = array<i32>} : memref<8x1xf32, #tpu.memory_space<vmem>>, vector<8x1xf32>,
    } else {
    }
    %c0 = arith.constant 0 : index
    %c0_1 = arith.constant 0 : index
    %3 = vector.load %arg2[%c0, %c0_1] : memref<8x32xf32, #tpu.memory_space<vmem>>, vector<8x32xf32>
    %c0_2 = arith.constant 0 : index
    %c0_3 = arith.constant 0 : index
    %4 = vector.load %arg5[%c0_2, %c0_3] : memref<8x32xf32, #tpu.memory_space<vmem>>, vector<8x32xf32>
    %cst = arith.constant dense<0.000000e+00> : vector<8x8xf32>
    %5 = tpu.matmul %3, %4, %cst {dimension_numbers = #tpu.dot_dimension_numbers<[1], [1], [0], [0], [0, 0, 1, 0], [], []>} : vector<8x32xf32>, vector<8x32xf32>, vector<8x8xf32> -> vector<8x8xf32>
    %c0_4 = arith.constant 0 : index
    %c0_5 = arith.constant 0 : index
    %6 = vector.load %arg2[%c0_4, %c0_5] : memref<8x32xf32, #tpu.memory_space<vmem>>, vector<8x32xf32>
    %c0_6 = arith.constant 0 : index
    %c0_7 = arith.constant 0 : index
    %7 = vector.load %arg4[%c0_6, %c0_7] : memref<8x32xf32, #tpu.memory_space<vmem>>, vector<8x32xf32>
    %cst_8 = arith.constant dense<0.000000e+00> : vector<8x8xf32>
    %8 = tpu.matmul %6, %7, %cst_8 {dimension_numbers = #tpu.dot_dimension_numbers<[1], [1], [0], [0], [0, 0, 1, 0], [], []>} : vector<8x32xf32>, vector<8x32xf32>, vector<8x8xf32> -> vector<8x8xf32>
    %c0_9 = arith.constant 0 : index
    %c0_10 = arith.constant 0 : index
    %9 = vector.load %arg3[%c0_9, %c0_10] : memref<8x16xf32, #tpu.memory_space<vmem>>, vector<8x16xf32>
    %c0_11 = arith.constant 0 : index
    %c0_12 = arith.constant 0 : index
    %10 = vector.load %arg6[%c0_11, %c0_12] : memref<8x16xf32, #tpu.memory_space<vmem>>, vector<8x16xf32>
    %cst_13 = arith.constant dense<0.000000e+00> : vector<8x8xf32>
    %11 = tpu.matmul %9, %10, %cst_13 {dimension_numbers = #tpu.dot_dimension_numbers<[1], [1], [0], [0], [0, 0, 1, 0], [], []>} : vector<8x16xf32>, vector<8x16xf32>, vector<8x8xf32> -> vector<8x8xf32>
    %12 = tpu.iota {dimensions = array<i32: 0>} : vector<8x8xi32>
    %c8_i32 = arith.constant 8 : i32
    %13 = arith.muli %arg0, %c8_i32 : i32
    %14 = vector.broadcast %13 : i32 to vector<8x8xi32>
    %15 = arith.addi %12, %14 : vector<8x8xi32>
    %16 = tpu.iota {dimensions = array<i32: 1>} : vector<8x8xi32>
    %c8_i32_14 = arith.constant 8 : i32
    %17 = arith.muli %arg1, %c8_i32_14 : i32
    %18 = vector.broadcast %17 : i32 to vector<8x8xi32>
    %19 = arith.addi %16, %18 : vector<8x8xi32>
    %20 = arith.cmpi eq, %19, %15 : vector<8x8xi32>
    %cst_15 = arith.constant 1.000000e+00 : f32
    %21 = vector.broadcast %cst_15 : f32 to vector<8x8xf32>
    %22 = arith.subf %21, %11 : vector<8x8xf32>
    %cst_16 = arith.constant 5.000000e-01 : f32
    %23 = vector.broadcast %cst_16 : f32 to vector<8x8xf32>
    %24 = arith.mulf %22, %23 : vector<8x8xf32>
    %25 = math.exp %5 : vector<8x8xf32>
    %26 = math.exp %8 : vector<8x8xf32>
    %27 = arith.addf %25, %26 : vector<8x8xf32>
    %28 = arith.mulf %24, %27 : vector<8x8xf32>
    %cst_17 = arith.constant 0.000000e+00 : f32
    %29 = vector.broadcast %cst_17 : f32 to vector<8x8xf32>
    %30 = arith.select %20, %29, %28 : vector<8x8xi1>, vector<8x8xf32>
    %c0_18 = arith.constant 0 : index
    %c0_19 = arith.constant 0 : index
    %31 = vector.load %arg8[%c0_18, %c0_19] : memref<8x1xf32, #tpu.memory_space<vmem>>, vector<8x1xf32>
    %cst_20 = arith.constant dense<0.000000e+00> : vector<8xf32>
    %32 = vector.multi_reduction <add>, %30, %cst_20 [1] : vector<8x8xf32> to vector<8xf32>
    %33 = vector.shape_cast %32 : vector<8xf32> to vector<8x1xf32>
    %34 = arith.addf %31, %33 : vector<8x1xf32>
    %c0_21 = arith.constant 0 : index
    %c0_22 = arith.constant 0 : index
    %35 = vector.load %arg8[%c0_21, %c0_22] : memref<8x1xf32, #tpu.memory_space<vmem>>, vector<8x1xf32>
    tpu.vector_store %arg8[%c0_21, %c0_22], %34 {strides = array<i32>} : memref<8x1xf32, #tpu.memory_space<vmem>>, vector<8x1xf32>,
    %c0_23 = arith.constant 0 : index
    %c0_24 = arith.constant 0 : index
    %36 = vector.load %arg9[%c0_23, %c0_24] : memref<8x1xf32, #tpu.memory_space<vmem>>, vector<8x1xf32>
    %cst_25 = arith.constant 0.000000e+00 : f32
    %37 = vector.broadcast %cst_25 : f32 to vector<8x8xf32>
    %38 = arith.select %20, %5, %37 : vector<8x8xi1>, vector<8x8xf32>
    %cst_26 = arith.constant dense<0.000000e+00> : vector<8xf32>
    %39 = vector.multi_reduction <add>, %38, %cst_26 [1] : vector<8x8xf32> to vector<8xf32>
    %40 = vector.shape_cast %39 : vector<8xf32> to vector<8x1xf32>
    %41 = arith.addf %36, %40 : vector<8x1xf32>
    %c0_27 = arith.constant 0 : index
    %c0_28 = arith.constant 0 : index
    %42 = vector.load %arg9[%c0_27, %c0_28] : memref<8x1xf32, #tpu.memory_space<vmem>>, vector<8x1xf32>
    tpu.vector_store %arg9[%c0_27, %c0_28], %41 {strides = array<i32>} : memref<8x1xf32, #tpu.memory_space<vmem>>, vector<8x1xf32>,
    %c1_i32 = arith.constant 1 : i32
    %43 = arith.cmpi eq, %arg1, %c1_i32 : i32
    %44 = arith.extui %43 : i1 to i32
    %c0_i32_29 = arith.constant 0 : i32
    %45 = arith.cmpi ne, %44, %c0_i32_29 : i32
    scf.if %45 {
      %c0_30 = arith.constant 0 : index
      %c0_31 = arith.constant 0 : index
      %46 = vector.load %arg8[%c0_30, %c0_31] : memref<8x1xf32, #tpu.memory_space<vmem>>, vector<8x1xf32>
      %cst_32 = arith.constant 9.99999997E-7 : f32
      %47 = vector.broadcast %cst_32 : f32 to vector<8x1xf32>
      %48 = arith.addf %46, %47 : vector<8x1xf32>
      %49 = math.log %48 : vector<8x1xf32>
      %c0_33 = arith.constant 0 : index
      %c0_34 = arith.constant 0 : index
      %50 = vector.load %arg9[%c0_33, %c0_34] : memref<8x1xf32, #tpu.memory_space<vmem>>, vector<8x1xf32>
      %51 = arith.subf %49, %50 : vector<8x1xf32>
      %c0_35 = arith.constant 0 : index
      %c0_36 = arith.constant 0 : index
      %52 = vector.load %arg7[%c0_35, %c0_36] : memref<8x1xf32, #tpu.memory_space<vmem>>, vector<8x1xf32>
      tpu.vector_store %arg7[%c0_35, %c0_36], %51 {strides = array<i32>} : memref<8x1xf32, #tpu.memory_space<vmem>>, vector<8x1xf32>,
    } else {
    }
    return
  }
  func.func @transform_0(%arg0: i32, %arg1: i32) -> (i32, i32) {
    %c0_i32 = arith.constant 0 : i32
    %c0_i32_0 = arith.constant 0 : i32
    return %arg0, %c0_i32 : i32, i32
  }
  func.func @transform_1(%arg0: i32, %arg1: i32) -> (i32, i32) {
    %c0_i32 = arith.constant 0 : i32
    %c0_i32_0 = arith.constant 0 : i32
    return %arg0, %c0_i32 : i32, i32
  }
  func.func @transform_2(%arg0: i32, %arg1: i32) -> (i32, i32) {
    %c0_i32 = arith.constant 0 : i32
    %c0_i32_0 = arith.constant 0 : i32
    return %arg1, %c0_i32 : i32, i32
  }
  func.func @transform_3(%arg0: i32, %arg1: i32) -> (i32, i32) {
    %c0_i32 = arith.constant 0 : i32
    %c0_i32_0 = arith.constant 0 : i32
    return %arg1, %c0_i32 : i32, i32
  }
  func.func @transform_4(%arg0: i32, %arg1: i32) -> (i32, i32) {
    %c0_i32 = arith.constant 0 : i32
    %c0_i32_0 = arith.constant 0 : i32
    return %arg1, %c0_i32 : i32, i32
  }
  func.func @transform_5(%arg0: i32, %arg1: i32) -> (i32, i32) {
    %c0_i32 = arith.constant 0 : i32
    %c0_i32_0 = arith.constant 0 : i32
    return %arg0, %c0_i32 : i32, i32
  }
}

</mosaic_0001>

<llo_original>
// kernel: ref_infonce_loss.1
$region0: #{ref_infonce_loss.1}
  #allocation0 [shape = 'u32[]', space=smem, size = 0x4, offset = 0x4, fixed_abs, tag = 'smem constant byte address 0x4 - core index']
  #allocation1 [shape = 'u32[144,128]{1,0:T(1,128)}', space=vmem, size = 0x12000, scoped, tag = 'internal scratch']
  #allocation2 [shape = 'f32[8,1]{1,0:T(8,128)}', space=vmem, size = 0x1000, scoped, tag = 'scratch operand']
  #allocation3 [shape = 'f32[8,1]{1,0:T(8,128)}', space=vmem, size = 0x1000, scoped, tag = 'scratch operand']
  %s0 = inlined_call_operand.vmem [shape: f32[16,32], index: 0, kind: input, shape index: {}, may-alias: {0,2}]
  %s1 = inlined_call_operand.vmem [shape: f32[16,16], index: 1, kind: input, shape index: {}, may-alias: {1,4}]
  %s2 = inlined_call_operand.vmem [shape: f32[16,32], index: 2, kind: input, shape index: {}, may-alias: {0,2}]
  %s3 = inlined_call_operand.vmem [shape: f32[16,32], index: 3, kind: input, shape index: {}]
  %s4 = inlined_call_operand.vmem [shape: f32[16,16], index: 4, kind: input, shape index: {}, may-alias: {1,4}]
  %s5 = inlined_call_operand.vmem [shape: f32[16,1], index: 5, kind: output, shape index: {}]
  %s6 = sld [smem:[#allocation0]]
  $region61: #{ref_infonce_loss.1} parent=0
    _
  %s8 = ssub.s32 1, %s6
  %s9 = scalar_select 0, %s8, %s6
  loop: start=0, step=1, limit=6
  $region2: #{ref_infonce_loss.1} parent=0 // loop_pre_header
    _
  $region3: #{ref_infonce_loss.1} parent=0 // loop_header
    %s11 = sphi 0, %s15
    %p12 = scmp.ge.s32.totalorder %s11, 6
    %s18 = sphi 0, %s30
    %s19 = sphi 0, %s26
    %s20 = sphi 0, %s18
    %s21 = sphi 0, %s19
    %s22 = sphi 0, %s20
    %s23 = sphi 0, %s21
    %s33 = sphi 0, %s35
    %s36 = sphi 0, %s33
    %s37 = sphi 0, %s36
    %s53 = sphi 0, %s37
    %s59 = sphi 0, %s61
    %s62 = sphi 0, %s59
    %s63 = sphi 0, %s62
    %s79 = sphi 0, %s63
    %s85 = sphi 0, %s87
    %s88 = sphi 0, %s85
    %s89 = sphi 0, %s88
    %s105 = sphi 0, %s89
    %s111 = sphi 0, %s113
    %s114 = sphi 0, %s111
    %s115 = sphi 0, %s114
    %s131 = sphi 0, %s115
    %s137 = sphi 0, %s139
    %s140 = sphi 0, %s137
    %s141 = sphi 0, %s140
    %s157 = sphi 0, %s141
    %s163 = sphi 0, %s165
    %s166 = sphi 0, %s163
    %s167 = sphi 0, %s166
    %s183 = sphi 0, %s167
  $region4: #{ref_infonce_loss.1} parent=0 // loop_header_branch
    %14 = sbr.rel (%p12) target = $region8
  $region5: #{ref_infonce_loss.1} parent=0 // loop_body
    %s16 = ssub.s32 %s11, 1
    %s17 = ssub.s32 %s11, 2
    %s24 = sadd.s32 1, %s19
    %p25 = scmp.ge.s32.totalorder %s24, 2
    %s26 = scalar_select %p25, 0, %s24
    %s27 = sadd.s32 1, %s18
    %s28 = scalar_select %p25, %s27, %s18
    %p29 = scmp.ge.s32.totalorder %s28, 2
    %s30 = scalar_select %p29, 0, %s28
    %s31 = ssub.s32 %s18, %s30
    %p32 = scmp.eq.s32.totalorder %s31, 0
    %s34 = sadd.s32 %s33, 1
    %s35 = scalar_select %p32, %s33, %s34
    %p38 = pneg %p32
    %p39 = scmp.eq.s32.totalorder %s11, 3
    %p40 = por %p38, %p39
    %p41 = scmp.ne.s32.totalorder %s33, %s36
    %p42 = scmp.eq.s32.totalorder %s11, 0
    %p43 = por %p41, %p42
    %p44 = scmp.ne.s32.totalorder %s33, %s36
    %p45 = scmp.eq.s32.totalorder %s16, 3
    %p46 = por %p44, %p45
    %p47 = scmp.ne.s32.totalorder %s36, %s37
    %p48 = scmp.eq.s32.totalorder %s16, 0
    %p49 = por %p47, %p48
    %p50 = scmp.ne.s32.totalorder %s36, %s37
    %p51 = scmp.eq.s32.totalorder %s17, 3
    %p52 = por %p50, %p51
    %p54 = scmp.ne.s32.totalorder %s37, %s53
    %p55 = scmp.eq.s32.totalorder %s17, 0
    %p56 = por %p54, %p55
    %s57 = ssub.s32 %s18, %s30
    %p58 = scmp.eq.s32.totalorder %s57, 0
    %s60 = sadd.s32 %s59, 1
    %s61 = scalar_select %p58, %s59, %s60
    %p64 = pneg %p58
    %p65 = scmp.eq.s32.totalorder %s11, 3
    %p66 = por %p64, %p65
    %p67 = scmp.ne.s32.totalorder %s59, %s62
    %p68 = scmp.eq.s32.totalorder %s11, 0
    %p69 = por %p67, %p68
    %p70 = scmp.ne.s32.totalorder %s59, %s62
    %p71 = scmp.eq.s32.totalorder %s16, 3
    %p72 = por %p70, %p71
    %p73 = scmp.ne.s32.totalorder %s62, %s63
    %p74 = scmp.eq.s32.totalorder %s16, 0
    %p75 = por %p73, %p74
    %p76 = scmp.ne.s32.totalorder %s62, %s63
    %p77 = scmp.eq.s32.totalorder %s17, 3
    %p78 = por %p76, %p77
    %p80 = scmp.ne.s32.totalorder %s63, %s79
    %p81 = scmp.eq.s32.totalorder %s17, 0
    %p82 = por %p80, %p81
    %s83 = ssub.s32 %s19, %s26
    %p84 = scmp.eq.s32.totalorder %s83, 0
    %s86 = sadd.s32 %s85, 1
    %s87 = scalar_select %p84, %s85, %s86
    %p90 = pneg %p84
    %p91 = scmp.eq.s32.totalorder %s11, 3
    %p92 = por %p90, %p91
    %p93 = scmp.ne.s32.totalorder %s85, %s88
    %p94 = scmp.eq.s32.totalorder %s11, 0
    %p95 = por %p93, %p94
    %p96 = scmp.ne.s32.totalorder %s85, %s88
    %p97 = scmp.eq.s32.totalorder %s16, 3
    %p98 = por %p96, %p97
    %p99 = scmp.ne.s32.totalorder %s88, %s89
    %p100 = scmp.eq.s32.totalorder %s16, 0
    %p101 = por %p99, %p100
    %p102 = scmp.ne.s32.totalorder %s88, %s89
    %p103 = scmp.eq.s32.totalorder %s17, 3
    %p104 = por %p102, %p103
    %p106 = scmp.ne.s32.totalorder %s89, %s105
    %p107 = scmp.eq.s32.totalorder %s17, 0
    %p108 = por %p106, %p107
    %s109 = ssub.s32 %s19, %s26
    %p110 = scmp.eq.s32.totalorder %s109, 0
    %s112 = sadd.s32 %s111, 1
    %s113 = scalar_select %p110, %s111, %s112
    %p116 = pneg %p110
    %p117 = scmp.eq.s32.totalorder %s11, 3
    %p118 = por %p116, %p117
    %p119 = scmp.ne.s32.totalorder %s111, %s114
    %p120 = scmp.eq.s32.totalorder %s11, 0
    %p121 = por %p119, %p120
    %p122 = scmp.ne.s32.totalorder %s111, %s114
    %p123 = scmp.eq.s32.totalorder %s16, 3
    %p124 = por %p122, %p123
    %p125 = scmp.ne.s32.totalorder %s114, %s115
    %p126 = scmp.eq.s32.totalorder %s16, 0
    %p127 = por %p125, %p126
    %p128 = scmp.ne.s32.totalorder %s114, %s115
    %p129 = scmp.eq.s32.totalorder %s17, 3
    %p130 = por %p128, %p129
    %p132 = scmp.ne.s32.totalorder %s115, %s131
    %p133 = scmp.eq.s32.totalorder %s17, 0
    %p134 = por %p132, %p133
    %s135 = ssub.s32 %s19, %s26
    %p136 = scmp.eq.s32.totalorder %s135, 0
    %s138 = sadd.s32 %s137, 1
    %s139 = scalar_select %p136, %s137, %s138
    %p142 = pneg %p136
    %p143 = scmp.eq.s32.totalorder %s11, 3
    %p144 = por %p142, %p143
    %p145 = scmp.ne.s32.totalorder %s137, %s140
    %p146 = scmp.eq.s32.totalorder %s11, 0
    %p147 = por %p145, %p146
    %p148 = scmp.ne.s32.totalorder %s137, %s140
    %p149 = scmp.eq.s32.totalorder %s16, 3
    %p150 = por %p148, %p149
    %p151 = scmp.ne.s32.totalorder %s140, %s141
    %p152 = scmp.eq.s32.totalorder %s16, 0
    %p153 = por %p151, %p152
    %p154 = scmp.ne.s32.totalorder %s140, %s141
    %p155 = scmp.eq.s32.totalorder %s17, 3
    %p156 = por %p154, %p155
    %p158 = scmp.ne.s32.totalorder %s141, %s157
    %p159 = scmp.eq.s32.totalorder %s17, 0
    %p160 = por %p158, %p159
    %s161 = ssub.s32 %s18, %s30
    %p162 = scmp.eq.s32.totalorder %s161, 0
    %s164 = sadd.s32 %s163, 1
    %s165 = scalar_select %p162, %s163, %s164
    %p168 = pneg %p162
    %p169 = scmp.eq.s32.totalorder %s11, 3
    %p170 = por %p168, %p169
    %p171 = scmp.ne.s32.totalorder %s163, %s166
    %p172 = scmp.eq.s32.totalorder %s11, 0
    %p173 = por %p171, %p172
    %p174 = scmp.ne.s32.totalorder %s163, %s166
    %p175 = scmp.eq.s32.totalorder %s16, 3
    %p176 = por %p174, %p175
    %p177 = scmp.ne.s32.totalorder %s166, %s167
    %p178 = scmp.eq.s32.totalorder %s16, 0
    %p179 = por %p177, %p178
    %p180 = scmp.ne.s32.totalorder %s166, %s167
    %p181 = scmp.eq.s32.totalorder %s17, 3
    %p182 = por %p180, %p181
    %p184 = scmp.ne.s32.totalorder %s167, %s183
    %p185 = scmp.eq.s32.totalorder %s17, 0
    %p186 = por %p184, %p185
    %p187 = scmp.le.s32.totalorder 1, %s11
    %p188 = scmp.lt.s32.totalorder %s11, 5
    %p189 = pnand %p187, %p188
    %p190 = pneg %p189
    // Predicated region
    $region9: #{ref_infonce_loss.1} parent=5 // pred_check
      _
    $region10: #{ref_infonce_loss.1} parent=5 // pred_check_branch
      %192 = sbr.rel (%p189) target = $region12
    $region11: #{ref_infonce_loss.1} parent=5 // pred_region
      %s193 = ssub.s32 %s11, 1
    $region12: #{ref_infonce_loss.1} parent=5 // pred_fallthru
      _
    %p194 = scmp.lt.s32.totalorder %s11, 4
    // Predicated region
    $region13: #{ref_infonce_loss.1} parent=5 // pred_check
      %p195 = pneg %p194
    $region14: #{ref_infonce_loss.1} parent=5 // pred_check_branch
      %197 = sbr.rel (%p195) target = $region16
    $region15: #{ref_infonce_loss.1} parent=5 // pred_region
      // Predicated region
      $region17: #{ref_infonce_loss.1} parent=15 // pred_check
        %p198 = pneg %p43
      $region18: #{ref_infonce_loss.1} parent=15 // pred_check_branch
        %200 = sbr.rel (%p198) target = $region20
      $region19: #{ref_infonce_loss.1} parent=15 // pred_region
        %p201 = scmp.lt.s32.totalorder %s18, 1
        %s202 = scalar_select %p201, %s18, 1
        %s203 = smul.addr %s202, 8
        %s204 = scalar_lea.vmem %s0, %s203
      $region20: #{ref_infonce_loss.1} parent=15 // pred_fallthru
        _
      // Predicated region
      $region21: #{ref_infonce_loss.1} parent=15 // pred_check
        %p205 = pneg %p69
      $region22: #{ref_infonce_loss.1} parent=15 // pred_check_branch
        %207 = sbr.rel (%p205) target = $region24
      $region23: #{ref_infonce_loss.1} parent=15 // pred_region
        %p208 = scmp.lt.s32.totalorder %s18, 1
        %s209 = scalar_select %p208, %s18, 1
        %s210 = smul.addr %s209, 8
        %s211 = scalar_lea.vmem %s1, %s210
      $region24: #{ref_infonce_loss.1} parent=15 // pred_fallthru
        _
      // Predicated region
      $region25: #{ref_infonce_loss.1} parent=15 // pred_check
        %p212 = pneg %p95
      $region26: #{ref_infonce_loss.1} parent=15 // pred_check_branch
        %214 = sbr.rel (%p212) target = $region28
      $region27: #{ref_infonce_loss.1} parent=15 // pred_region
        %p215 = scmp.lt.s32.totalorder %s19, 1
        %s216 = scalar_select %p215, %s19, 1
        %s217 = smul.addr %s216, 8
        %s218 = scalar_lea.vmem %s2, %s217
      $region28: #{ref_infonce_loss.1} parent=15 // pred_fallthru
        _
      // Predicated region
      $region29: #{ref_infonce_loss.1} parent=15 // pred_check
        %p219 = pneg %p121
      $region30: #{ref_infonce_loss.1} parent=15 // pred_check_branch
        %221 = sbr.rel (%p219) target = $region32
      $region31: #{ref_infonce_loss.1} parent=15 // pred_region
        %p222 = scmp.lt.s32.totalorder %s19, 1
        %s223 = scalar_select %p222, %s19, 1
        %s224 = smul.addr %s223, 8
        %s225 = scalar_lea.vmem %s3, %s224
      $region32: #{ref_infonce_loss.1} parent=15 // pred_fallthru
        _
      // Predicated region
      $region33: #{ref_infonce_loss.1} parent=15 // pred_check
        %p226 = pneg %p147
      $region34: #{ref_infonce_loss.1} parent=15 // pred_check_branch
        %228 = sbr.rel (%p226) target = $region36
      $region35: #{ref_infonce_loss.1} parent=15 // pred_region
        %p229 = scmp.lt.s32.totalorder %s19, 1
        %s230 = scalar_select %p229, %s19, 1
        %s231 = smul.addr %s230, 8
        %s232 = scalar_lea.vmem %s4, %s231
      $region36: #{ref_infonce_loss.1} parent=15 // pred_fallthru
        _
    $region16: #{ref_infonce_loss.1} parent=5 // pred_fallthru
      _
    %p233 = scmp.le.s32.totalorder 1, %s11
    %p234 = scmp.lt.s32.totalorder %s11, 5
    %p235 = pnand %p233, %p234
    %p236 = pneg %p235
    // Predicated region
    $region37: #{ref_infonce_loss.1} parent=5 // pred_check
      _
    $region38: #{ref_infonce_loss.1} parent=5 // pred_check_branch
      %238 = sbr.rel (%p235) target = $region40
    $region39: #{ref_infonce_loss.1} parent=5 // pred_region
      %s239 = ssub.s32 %s11, 1
      %p240 = scmp.lt.s32.totalorder %s20, 1
      %s241 = scalar_select %p240, %s20, 1
      %s242 = smul.addr %s241, 8
      %s243 = scalar_lea.vmem %s0, %s242
      %p244 = pneg %p49
      %p245 = pneg %p46
      %p246 = scmp.lt.s32.totalorder %s20, 1
      %s247 = scalar_select %p246, %s20, 1
      %s248 = smul.addr %s247, 8
      %s249 = scalar_lea.vmem %s1, %s248
      %p250 = pneg %p75
      %p251 = pneg %p72
      %p252 = scmp.lt.s32.totalorder %s21, 1
      %s253 = scalar_select %p252, %s21, 1
      %s254 = smul.addr %s253, 8
      %s255 = scalar_lea.vmem %s2, %s254
      %p256 = pneg %p101
      %p257 = pneg %p98
      %p258 = scmp.lt.s32.totalorder %s21, 1
      %s259 = scalar_select %p258, %s21, 1
      %s260 = smul.addr %s259, 8
      %s261 = scalar_lea.vmem %s3, %s260
      %p262 = pneg %p127
      %p263 = pneg %p124
      %p264 = scmp.lt.s32.totalorder %s21, 1
      %s265 = scalar_select %p264, %s21, 1
      %s266 = smul.addr %s265, 8
      %s267 = scalar_lea.vmem %s4, %s266
      %p268 = pneg %p153
      %p269 = pneg %p150
      %p270 = pneg %p179
      %p271 = pneg %p176
      %p272 = scmp.lt.s32.totalorder %s20, 1
      %s273 = scalar_select %p272, %s20, 1
      %s274 = smul.addr %s273, 8
      %s275 = scalar_lea.vmem %s5, %s274
      %p276 = scmp.lt.s32.totalorder %s20, 1
      %s277 = scalar_select %p276, %s20, 1
      %s278 = smul.addr %s277, 8
      %s279 = scalar_lea.vmem %s0, %s278
      %p280 = scmp.lt.s32.totalorder %s20, 1
      %s281 = scalar_select %p280, %s20, 1
      %s282 = smul.addr %s281, 8
      %s283 = scalar_lea.vmem %s1, %s282
      %p284 = scmp.lt.s32.totalorder %s21, 1
      %s285 = scalar_select %p284, %s21, 1
      %s286 = smul.addr %s285, 8
      %s287 = scalar_lea.vmem %s2, %s286
      %p288 = scmp.lt.s32.totalorder %s21, 1
      %s289 = scalar_select %p288, %s21, 1
      %s290 = smul.addr %s289, 8
      %s291 = scalar_lea.vmem %s3, %s290
      %p292 = scmp.lt.s32.totalorder %s21, 1
      %s293 = scalar_select %p292, %s21, 1
      %s294 = smul.addr %s293, 8
      %s295 = scalar_lea.vmem %s4, %s294
      %p296 = scmp.lt.s32.totalorder %s20, 1
      %s297 = scalar_select %p296, %s20, 1
      %s298 = smul.addr %s297, 8
      %s299 = scalar_lea.vmem %s5, %s298
      %p300 = scmp.eq.s32.totalorder %s21, 0
      // Predicated region
      $region41: #{ref_infonce_loss.1} parent=39 // pred_check
        %p301 = pneg %p300
      $region42: #{ref_infonce_loss.1} parent=39 // pred_check_branch
        %303 = sbr.rel (%p301) target = $region44
      $region43: #{ref_infonce_loss.1} parent=39 // pred_region
        %vm304 = vcmask 7168
        %305 = vst.msk [vmem:[#allocation2] sm:$0xff] %vm304, 0.0
        %306 = vst.msk [vmem:[#allocation3] sm:$0xff] %vm304, 0.0
      $region44: #{ref_infonce_loss.1} parent=39 // pred_fallthru
        _
      %v307 = vld [vmem:[%s279] sm:$0xff]
      %v308 = vld [vmem:[%s291] sm:$0xff]
      %vm309 = vcmask 261120
      %v311 = vsel %vm309, %v307, 0
      %v314 = vsel %vm309, %v308, 0
      %316 = vmatprep.subr.mxu0 0.0
      %317 = vmatpush1.xpose.msra.mxu0 %v314
      %318 = vmatprep.subr.mxu0 0.0
      %319 = vmatpush1.xpose.msra.mxu0 0.0
      %320 = vmatprep.subr.mxu0 0.0
      %321 = vmatpush1.xpose.msra.mxu0 0.0
      %322 = vmatprep.subr.mxu0 0.0
      %323 = vmatpush1.xpose.msra.mxu0 0.0
      %324 = vmatprep.subr.mxu0 0.0
      %325 = vmatpush1.xpose.msra.mxu0 0.0
      %326 = vmatprep.subr.mxu0 0.0
      %327 = vmatpush1.xpose.msra.mxu0 0.0
      %328 = vmatprep.subr.mxu0 0.0
      %329 = vmatpush1.xpose.msra.mxu0 0.0
      %330 = vmatprep.subr.mxu0 0.0
      %331 = vmatpush1.xpose.msra.mxu0 0.0
      %332 = vmatprep.subr.mxu0 0.0
      %333 = vmatpush1.xpose.msra.mxu0 0.0
      %334 = vmatprep.subr.mxu0 0.0
      %335 = vmatpush1.xpose.msra.mxu0 0.0
      %336 = vmatprep.subr.mxu0 0.0
      %337 = vmatpush1.xpose.msra.mxu0 0.0
      %338 = vmatprep.subr.mxu0 0.0
      %339 = vmatpush1.xpose.msra.mxu0 0.0
      %340 = vmatprep.subr.mxu0 0.0
      %341 = vmatpush1.xpose.msra.mxu0 0.0
      %342 = vmatprep.subr.mxu0 0.0
      %343 = vmatpush1.xpose.msra.mxu0 0.0
      %344 = vmatprep.subr.mxu0 0.0
      %345 = vmatpush1.xpose.msra.mxu0 0.0
      %346 = vmatprep.subr.mxu0 0.0
      %347 = vmatpush1.xpose.msra.mxu0 0.0
      %348 = vmatprep.subr.mxu0 0.0
      %349 = vmatpush1.xpose.msra.mxu0 0.0
      %350 = vmatprep.subr.mxu0 0.0
      %351 = vmatpush1.xpose.msra.mxu0 0.0
      %352 = vmatprep.subr.mxu0 0.0
      %353 = vmatpush1.xpose.msra.mxu0 0.0
      %354 = vmatprep.subr.mxu0 0.0
      %355 = vmatpush1.xpose.msra.mxu0 0.0
      %356 = vmatprep.subr.mxu0 0.0
      %357 = vmatpush1.xpose.msra.mxu0 0.0
      %358 = vmatprep.subr.mxu0 0.0
      %359 = vmatpush1.xpose.msra.mxu0 0.0
      %360 = vmatprep.subr.mxu0 0.0
      %361 = vmatpush1.xpose.msra.mxu0 0.0
      %362 = vmatprep.subr.mxu0 0.0
      %363 = vmatpush1.xpose.msra.mxu0 0.0
      %364 = vmatprep.subr.mxu0 0.0
      %365 = vmatpush1.xpose.msra.mxu0 0.0
      %366 = vmatprep.subr.mxu0 0.0
      %367 = vmatpush1.xpose.msra.mxu0 0.0
      %368 = vmatprep.subr.mxu0 0.0
      %369 = vmatpush1.xpose.msra.mxu0 0.0
      %370 = vmatprep.subr.mxu0 0.0
      %371 = vmatpush1.xpose.msra.mxu0 0.0
      %372 = vmatprep.subr.mxu0 0.0
      %373 = vmatpush1.xpose.msra.mxu0 0.0
      %374 = vmatprep.subr.mxu0 0.0
      %375 = vmatpush1.xpose.msra.mxu0 0.0
      %376 = vmatprep.subr.mxu0 0.0
      %377 = vmatpush1.xpose.msra.mxu0 0.0
      %378 = vmatprep.subr.mxu0 0.0
      %379 = vmatpush1.xpose.msra.mxu0 0.0
      %380 = vmatprep.mubr.f32.mxu0 0.0
      %381 = vmatmul.mubr.f32.gmra.mrb[0].mxu0 %v311
      %v382 = vpop.f32.mrb[0].mxu0
      %v383 = vadd.f32 0.0, %v382
      %v384 = vpop.f32.mrb[0].mxu0
      %385 = vdwg.mxu0
      %v386 = vld [vmem:[%s287] sm:$0xff]
      %v388 = vsel %vm309, %v386, 0
      %390 = vmatprep.subr.mxu0 0.0
      %391 = vmatpush1.xpose.msra.mxu0 %v388
      %392 = vmatprep.subr.mxu0 0.0
      %393 = vmatpush1.xpose.msra.mxu0 0.0
      %394 = vmatprep.subr.mxu0 0.0
      %395 = vmatpush1.xpose.msra.mxu0 0.0
      %396 = vmatprep.subr.mxu0 0.0
      %397 = vmatpush1.xpose.msra.mxu0 0.0
      %398 = vmatprep.subr.mxu0 0.0
      %399 = vmatpush1.xpose.msra.mxu0 0.0
      %400 = vmatprep.subr.mxu0 0.0
      %401 = vmatpush1.xpose.msra.mxu0 0.0
      %402 = vmatprep.subr.mxu0 0.0
      %403 = vmatpush1.xpose.msra.mxu0 0.0
      %404 = vmatprep.subr.mxu0 0.0
      %405 = vmatpush1.xpose.msra.mxu0 0.0
      %406 = vmatprep.subr.mxu0 0.0
      %407 = vmatpush1.xpose.msra.mxu0 0.0
      %408 = vmatprep.subr.mxu0 0.0
      %409 = vmatpush1.xpose.msra.mxu0 0.0
      %410 = vmatprep.subr.mxu0 0.0
      %411 = vmatpush1.xpose.msra.mxu0 0.0
      %412 = vmatprep.subr.mxu0 0.0
      %413 = vmatpush1.xpose.msra.mxu0 0.0
      %414 = vmatprep.subr.mxu0 0.0
      %415 = vmatpush1.xpose.msra.mxu0 0.0
      %416 = vmatprep.subr.mxu0 0.0
      %417 = vmatpush1.xpose.msra.mxu0 0.0
      %418 = vmatprep.subr.mxu0 0.0
      %419 = vmatpush1.xpose.msra.mxu0 0.0
      %420 = vmatprep.subr.mxu0 0.0
      %421 = vmatpush1.xpose.msra.mxu0 0.0
      %422 = vmatprep.subr.mxu0 0.0
      %423 = vmatpush1.xpose.msra.mxu0 0.0
      %424 = vmatprep.subr.mxu0 0.0
      %425 = vmatpush1.xpose.msra.mxu0 0.0
      %426 = vmatprep.subr.mxu0 0.0
      %427 = vmatpush1.xpose.msra.mxu0 0.0
      %428 = vmatprep.subr.mxu0 0.0
      %429 = vmatpush1.xpose.msra.mxu0 0.0
      %430 = vmatprep.subr.mxu0 0.0
      %431 = vmatpush1.xpose.msra.mxu0 0.0
      %432 = vmatprep.subr.mxu0 0.0
      %433 = vmatpush1.xpose.msra.mxu0 0.0
      %434 = vmatprep.subr.mxu0 0.0
      %435 = vmatpush1.xpose.msra.mxu0 0.0
      %436 = vmatprep.subr.mxu0 0.0
      %437 = vmatpush1.xpose.msra.mxu0 0.0
      %438 = vmatprep.subr.mxu0 0.0
      %439 = vmatpush1.xpose.msra.mxu0 0.0
      %440 = vmatprep.subr.mxu0 0.0
      %441 = vmatpush1.xpose.msra.mxu0 0.0
      %442 = vmatprep.subr.mxu0 0.0
      %443 = vmatpush1.xpose.msra.mxu0 0.0
      %444 = vmatprep.subr.mxu0 0.0
      %445 = vmatpush1.xpose.msra.mxu0 0.0
      %446 = vmatprep.subr.mxu0 0.0
      %447 = vmatpush1.xpose.msra.mxu0 0.0
      %448 = vmatprep.subr.mxu0 0.0
      %449 = vmatpush1.xpose.msra.mxu0 0.0
      %450 = vmatprep.subr.mxu0 0.0
      %451 = vmatpush1.xpose.msra.mxu0 0.0
      %452 = vmatprep.subr.mxu0 0.0
      %453 = vmatpush1.xpose.msra.mxu0 0.0
      %454 = vmatprep.mubr.f32.mxu0 0.0
      %455 = vmatmul.mubr.f32.gmra.mrb[0].mxu0 %v311
      %v456 = vpop.f32.mrb[0].mxu0
      %v457 = vadd.f32 0.0, %v456
      %v458 = vpop.f32.mrb[0].mxu0
      %459 = vdwg.mxu0
      %v460 = vld [vmem:[%s283] sm:$0xff]
      %v461 = vld [vmem:[%s295] sm:$0xff]
      %vm462 = vcmask 130048
      %v464 = vsel %vm462, %v460, 0
      %v467 = vsel %vm462, %v461, 0
      %469 = vmatprep.subr.mxu0 0.0
      %470 = vmatpush1.xpose.msra.mxu0 %v467
      %471 = vmatprep.subr.mxu0 0.0
      %472 = vmatpush1.xpose.msra.mxu0 0.0
      %473 = vmatprep.subr.mxu0 0.0
      %474 = vmatpush1.xpose.msra.mxu0 0.0
      %475 = vmatprep.subr.mxu0 0.0
      %476 = vmatpush1.xpose.msra.mxu0 0.0
      %477 = vmatprep.subr.mxu0 0.0
      %478 = vmatpush1.xpose.msra.mxu0 0.0
      %479 = vmatprep.subr.mxu0 0.0
      %480 = vmatpush1.xpose.msra.mxu0 0.0
      %481 = vmatprep.subr.mxu0 0.0
      %482 = vmatpush1.xpose.msra.mxu0 0.0
      %483 = vmatprep.subr.mxu0 0.0
      %484 = vmatpush1.xpose.msra.mxu0 0.0
      %485 = vmatprep.subr.mxu0 0.0
      %486 = vmatpush1.xpose.msra.mxu0 0.0
      %487 = vmatprep.subr.mxu0 0.0
      %488 = vmatpush1.xpose.msra.mxu0 0.0
      %489 = vmatprep.subr.mxu0 0.0
      %490 = vmatpush1.xpose.msra.mxu0 0.0
      %491 = vmatprep.subr.mxu0 0.0
      %492 = vmatpush1.xpose.msra.mxu0 0.0
      %493 = vmatprep.subr.mxu0 0.0
      %494 = vmatpush1.xpose.msra.mxu0 0.0
      %495 = vmatprep.subr.mxu0 0.0
      %496 = vmatpush1.xpose.msra.mxu0 0.0
      %497 = vmatprep.subr.mxu0 0.0
      %498 = vmatpush1.xpose.msra.mxu0 0.0
      %499 = vmatprep.subr.mxu0 0.0
      %500 = vmatpush1.xpose.msra.mxu0 0.0
      %501 = vmatprep.subr.mxu0 0.0
      %502 = vmatpush1.xpose.msra.mxu0 0.0
      %503 = vmatprep.subr.mxu0 0.0
      %504 = vmatpush1.xpose.msra.mxu0 0.0
      %505 = vmatprep.subr.mxu0 0.0
      %506 = vmatpush1.xpose.msra.mxu0 0.0
      %507 = vmatprep.subr.mxu0 0.0
      %508 = vmatpush1.xpose.msra.mxu0 0.0
      %509 = vmatprep.subr.mxu0 0.0
      %510 = vmatpush1.xpose.msra.mxu0 0.0
      %511 = vmatprep.subr.mxu0 0.0
      %512 = vmatpush1.xpose.msra.mxu0 0.0
      %513 = vmatprep.subr.mxu0 0.0
      %514 = vmatpush1.xpose.msra.mxu0 0.0
      %515 = vmatprep.subr.mxu0 0.0
      %516 = vmatpush1.xpose.msra.mxu0 0.0
      %517 = vmatprep.subr.mxu0 0.0
      %518 = vmatpush1.xpose.msra.mxu0 0.0
      %519 = vmatprep.subr.mxu0 0.0
      %520 = vmatpush1.xpose.msra.mxu0 0.0
      %521 = vmatprep.subr.mxu0 0.0
      %522 = vmatpush1.xpose.msra.mxu0 0.0
      %523 = vmatprep.subr.mxu0 0.0
      %524 = vmatpush1.xpose.msra.mxu0 0.0
      %525 = vmatprep.subr.mxu0 0.0
      %526 = vmatpush1.xpose.msra.mxu0 0.0
      %527 = vmatprep.subr.mxu0 0.0
      %528 = vmatpush1.xpose.msra.mxu0 0.0
      %529 = vmatprep.subr.mxu0 0.0
      %530 = vmatpush1.xpose.msra.mxu0 0.0
      %531 = vmatprep.subr.mxu0 0.0
      %532 = vmatpush1.xpose.msra.mxu0 0.0
      %533 = vmatprep.mubr.f32.mxu0 0.0
      %534 = vmatmul.mubr.f32.gmra.mrb[0].mxu0 %v464
      %v535 = vpop.f32.mrb[0].mxu0
      %v536 = vadd.f32 0.0, %v535
      %v537 = vpop.f32.mrb[0].mxu0
      %538 = vdwg.mxu0
      %v539 = vlaneseq
      %v540 = vshrl.u32 %v539, 7
      %s541 = smul.u32 %s20, 8
      %v542 = vstv %s541
      %v543 = vadd.s32 %v540, %v542
      %v544 = vlaneseq
      %v545 = vand.u32 %v544, 127
      %s546 = smul.u32 %s21, 8
      %v547 = vstv %s546
      %v548 = vadd.s32 %v545, %v547
      %vm549 = vcmp.eq.s32.totalorder %v548, %v543
      %v550 = vsub.f32 1.0, %v536
      %v551 = vmul.f32 %v550, 0.5
      %v552 = vmul.f32 %v383, 1.442695
      %v553 = vpow.pop %v552
      %v554 = vmul.f32 %v457, 1.442695
      %v555 = vpow.pop %v554
      %v556 = vadd.f32 %v553, %v555
      %v557 = vmul.f32 %v551, %v556
      %v558 = vsel %vm549, 0.0, %v557
      %v559 = vld [vmem:[#allocation2] sm:$0xff]
      %vm560 = vcmask 64512
      %v561 = vsel %vm560, %v558, 0.0
      %562 = vadd.xlane.f32.xlu0 %v561
      %v563 = vpop.xlane.xlu0 %562
      %v564 = vadd.f32 %v559, %v563
      %vm565 = vcmask 7168
      %566 = vst.msk [vmem:[#allocation2] sm:$0xff] %vm565, %v564
      %v567 = vld [vmem:[#allocation3] sm:$0xff]
      %v568 = vsel %vm549, %v383, 0.0
      %v569 = vsel %vm560, %v568, 0.0
      %570 = vadd.xlane.f32.xlu0 %v569
      %v571 = vpop.xlane.xlu0 %570
      %v572 = vadd.f32 %v567, %v571
      %573 = vst.msk [vmem:[#allocation3] sm:$0xff] %vm565, %v572
      %p574 = scmp.eq.s32.totalorder %s21, 1
      // Predicated region
      $region45: #{ref_infonce_loss.1} parent=39 // pred_check
        %p575 = pneg %p574
      $region46: #{ref_infonce_loss.1} parent=39 // pred_check_branch
        %577 = sbr.rel (%p575) target = $region48
      $region47: #{ref_infonce_loss.1} parent=39 // pred_region
        %v578 = vld [vmem:[#allocation2] sm:$0xff]
        %v579 = vadd.f32 %v578, 1e-06
        %v580 = vlog2.pop %v579
        %v581 = vmul.f32 %v580, 0.6931472
        %v582 = vld [vmem:[#allocation3] sm:$0xff]
        %v583 = vsub.f32 %v581, %v582
        %584 = vst.msk [vmem:[%s299] sm:$0xff] %vm565, %v583
      $region48: #{ref_infonce_loss.1} parent=39 // pred_fallthru
        _
      %p585 = scmp.lt.s32.totalorder %s20, 1
      %s586 = scalar_select %p585, %s20, 1
      %s587 = smul.addr %s586, 8
      %s588 = scalar_lea.vmem %s5, %s587
      // Predicated region
      $region49: #{ref_infonce_loss.1} parent=39 // pred_check
        %p589 = pneg %p176
      $region50: #{ref_infonce_loss.1} parent=39 // pred_check_branch
        %591 = sbr.rel (%p589) target = $region52
      $region51: #{ref_infonce_loss.1} parent=39 // pred_region
        _
      $region52: #{ref_infonce_loss.1} parent=39 // pred_fallthru
        _
    $region40: #{ref_infonce_loss.1} parent=5 // pred_fallthru
      _
    %p592 = scmp.le.s32.totalorder 2, %s11
    // Predicated region
    $region53: #{ref_infonce_loss.1} parent=5 // pred_check
      %p593 = pneg %p592
    $region54: #{ref_infonce_loss.1} parent=5 // pred_check_branch
      %595 = sbr.rel (%p593) target = $region56
    $region55: #{ref_infonce_loss.1} parent=5 // pred_region
      %s596 = ssub.s32 %s11, 2
      // Predicated region
      $region57: #{ref_infonce_loss.1} parent=55 // pred_check
        %p597 = pneg %p182
      $region58: #{ref_infonce_loss.1} parent=55 // pred_check_branch
        %599 = sbr.rel (%p597) target = $region60
      $region59: #{ref_infonce_loss.1} parent=55 // pred_region
        %p600 = scmp.lt.s32.totalorder %s22, 1
        %s601 = scalar_select %p600, %s22, 1
        %s602 = smul.addr %s601, 8
        %s603 = scalar_lea.vmem %s5, %s602
      $region60: #{ref_infonce_loss.1} parent=55 // pred_fallthru
        _
    $region56: #{ref_infonce_loss.1} parent=5 // pred_fallthru
      _
  $region6: #{ref_infonce_loss.1} parent=0 // loop_footer
    %s15 = sadd.s32 1, %s11
  $region7: #{ref_infonce_loss.1} parent=0 // loop_footer_branch
    %10 = sbr.rel target = $region3
  $region8: #{ref_infonce_loss.1} parent=0 // loop_exit
    _

</llo_original>
